<compile_context>
chip_gen: v6e
topology: v6e:2x2x1
jax: 0.10.0
libtpu: 0.0.40
codegen_flags: <defaults>
</compile_context>

<pallas_src>
import functools

import jax
import jax.numpy as jnp
from jax import lax
from jax.experimental import pallas as pl
from jax.experimental.pallas import tpu as pltpu


# ---------------------------------------------------------------------------
# Tiled kernel (production path): per-(image, spatial-tile) 1x1-conv stem
#   (C_out, C_in) @ (C_in, TS) + bias + ReLU,
# fused with per-batch loss partials so the batch grid axis can be "parallel".
# ---------------------------------------------------------------------------
def _stem_kernel_tiled(x_ref, w_ref, b_ref, feat_ref, loss_ref, acc_ref,
                       *, hw, tile_s, c_out, grid_s):
    si = pl.program_id(1)          # spatial-tile index (innermost axis)

    @pl.when(si == 0)
    def _():                        # fresh per-batch loss accumulator
        acc_ref[...] = jnp.zeros_like(acc_ref)

    # (C_out, C_in) @ (C_in, TS) with f32 accumulation; spatial on lanes.
    # K = C_in is tiny so the MXU is <1% utilised — irrelevant: the kernel is
    # HBM-write-bound (output bytes ~ 8x input), so we don't optimise the dot.
    y = jnp.dot(w_ref[...], x_ref[...], preferred_element_type=jnp.float32)
    y = jnp.maximum(y + b_ref[...], 0.0)           # bias + ReLU on the VPU
    feat_ref[...] = y.astype(feat_ref.dtype)       # lane-dense (C_out, TS) store

    # Channel partial-reduce for the loss: sublane-aligned static slices of y,
    # pure VALU adds into an (8, TS) accumulator; the expensive cross-sublane +
    # cross-lane reduce happens once per image, inside the final-step pl.when.
    if c_out % 8 == 0:
        part = y[0:8, :]
        for g in range(1, c_out // 8):
            part = part + y[g * 8:(g + 1) * 8, :]
    else:
        part = jnp.sum(y, axis=0, keepdims=True)   # generic fallback (1, TS)

    if hw % tile_s != 0:
        # Ragged tail: mask the padded garbage lanes of the last tile only.
        # Keep it a select (NOT a multiply) so NaNs in padded lanes can't leak.
        last = grid_s - 1

        @pl.when(si != last)
        def _():
            acc_ref[...] = acc_ref[...] + part

        @pl.when(si == last)
        def _():
            col = lax.broadcasted_iota(jnp.int32, part.shape, 1)
            valid = hw - si * tile_s
            acc_ref[...] = acc_ref[...] + jnp.where(col < valid, part, 0.0)
    else:
        acc_ref[...] = acc_ref[...] + part

    @pl.when(si == grid_s - 1)
    def _():
        # Per-batch raw partial sum; normalisation happens in the JAX wrapper.
        row = jnp.sum(acc_ref[...], axis=0, keepdims=True)    # sublane reduce
        loss_ref[...] = jnp.sum(row, axis=1, keepdims=True)   # lane reduce


# ---------------------------------------------------------------------------
# Single-step kernel for tiny problems (whole (N, C_in, HW) resident in VMEM):
# avoids the per-grid-step pipeline prologue/epilogue overhead entirely.
# ---------------------------------------------------------------------------
def _stem_kernel_small(x_ref, w_ref, b_ref, feat_ref, loss_ref, *, n):
    total = jnp.zeros((1, 1), jnp.float32)
    for i in range(n):                      # n is tiny and static -> unrolled
        y = jnp.dot(w_ref[...], x_ref[i], preferred_element_type=jnp.float32)
        y = jnp.maximum(y + b_ref[...], 0.0)
        feat_ref[i] = y.astype(feat_ref.dtype)
        total = total + jnp.sum(y, axis=1, keepdims=True).sum(
            axis=0, keepdims=True)
    loss_ref[...] = total


def _stem_forward(img_nchw, w, b, *, max_tile_s=32768,
                  feat_dtype=jnp.float32, small_limit_bytes=2 << 20):
    """1x1-conv stem + bias + ReLU fused with the mean-feature training loss.

    img_nchw: (N, C_in, H, W) f32;  w: (C_out, C_in);  b: (C_out, 1).
    Returns (feat NCHW (N, C_out, H, W) in feat_dtype, scalar f32 loss).
    """
    n, c_in, h, wd = img_nchw.shape
    c_out = w.shape[0]
    hw = h * wd
    x = img_nchw.reshape(n, c_in, hw)              # free NCHW view, no copy
    inv_count = 1.0 / float(n * hw * c_out)
    itemsize_out = jnp.dtype(feat_dtype).itemsize

    # ---- small-problem fast path: single grid step -------------------------
    total_bytes = n * hw * (c_in * 4 + c_out * itemsize_out)
    if total_bytes <= small_limit_bytes and n <= 8:
        feat_flat, loss_part = pl.pallas_call(
            functools.partial(_stem_kernel_small, n=n),
            out_shape=(
                jax.ShapeDtypeStruct((n, c_out, hw), feat_dtype),
                jax.ShapeDtypeStruct((1, 1), jnp.float32),
            ),
            grid_spec=pltpu.PrefetchScalarGridSpec(
                num_scalar_prefetch=0,
                grid=(1,),
                in_specs=[
                    pl.BlockSpec((n, c_in, hw), lambda i: (0, 0, 0)),
                    pl.BlockSpec((c_out, c_in), lambda i: (0, 0)),
                    pl.BlockSpec((c_out, 1), lambda i: (0, 0)),
                ],
                out_specs=[
                    pl.BlockSpec((n, c_out, hw), lambda i: (0, 0, 0)),
                    pl.BlockSpec((1, 1), lambda i: (0, 0)),
                ],
            ),
            compiler_params=pltpu.CompilerParams(
                dimension_semantics=("arbitrary",)),
            cost_estimate=pl.CostEstimate(
                flops=2 * n * hw * c_in * c_out,
                transcendentals=0,
                bytes_accessed=4 * (n * c_in * hw + c_out * c_in + c_out + 1)
                + itemsize_out * n * c_out * hw),
        )(x, w, b)
        loss = jnp.sum(loss_part) * inv_count
        return feat_flat.reshape(n, c_out, h, wd), loss

    # ---- tiled path: big lane-dense spatial tiles ---------------------------
    max_tile_s = max(128, (max_tile_s // 128) * 128)   # keep a multiple of 128
    tile_s = hw if hw <= max_tile_s else max_tile_s
    grid_s = int(pl.cdiv(hw, tile_s))
    acc_rows = 8 if c_out % 8 == 0 else 1

    # v5e scoped-VMEM guard: default scoped limit is 16 MiB; raise it only if
    # the double-buffered blocks + accumulator scratch would exceed it.
    est_vmem = (2 * c_in * tile_s * 4                     # input, 2 buffers
                + 2 * c_out * tile_s * itemsize_out       # output, 2 buffers
                + acc_rows * tile_s * 4                   # loss accumulator
                + 4 * (c_out * c_in + c_out) + (64 << 10))
    compiler_kwargs = dict(
        # Per-batch loss partials -> batch axis is independent ("parallel",
        # sharded across v7x's two TensorCores); spatial axis carries the
        # resident accumulator -> "arbitrary".
        dimension_semantics=("parallel", "arbitrary"))
    if est_vmem > (14 << 20):
        compiler_kwargs["vmem_limit_bytes"] = int(est_vmem + (4 << 20))

    kernel = functools.partial(_stem_kernel_tiled, hw=hw, tile_s=tile_s,
                               c_out=c_out, grid_s=grid_s)
    feat_flat, loss_parts = pl.pallas_call(
        kernel,
        out_shape=(
            jax.ShapeDtypeStruct((n, c_out, hw), feat_dtype),
            jax.ShapeDtypeStruct((n, 1, 1), jnp.float32),
        ),
        grid_spec=pltpu.PrefetchScalarGridSpec(
            num_scalar_prefetch=0,
            grid=(n, grid_s),
            in_specs=[
                # activations tile: batch dim squeezed, spatial on lanes.
                # TODO(synk): add pipeline_mode=pl.Buffered(3) here if a trace
                # shows exposed input-DMA start latency (input only).
                pl.BlockSpec((None, c_in, tile_s), lambda ni, si: (ni, 0, si)),
                # weight / bias: resident (constant block index).
                pl.BlockSpec((c_out, c_in), lambda ni, si: (0, 0)),
                pl.BlockSpec((c_out, 1), lambda ni, si: (0, 0)),
            ],
            out_specs=[
                pl.BlockSpec((None, c_out, tile_s), lambda ni, si: (ni, 0, si)),
                # per-batch loss partial, resident across the spatial axis only
                pl.BlockSpec((None, 1, 1), lambda ni, si: (ni, 0, 0)),
            ],
            scratch_shapes=[pltpu.VMEM((acc_rows, tile_s), jnp.float32)],
        ),
        compiler_params=pltpu.CompilerParams(**compiler_kwargs),
        cost_estimate=pl.CostEstimate(
            flops=2 * n * hw * c_in * c_out,
            transcendentals=0,
            bytes_accessed=4 * (n * c_in * hw + c_out * c_in + c_out + n)
            + itemsize_out * n * c_out * hw),
    )(x, w, b)

    loss = jnp.sum(loss_parts) * inv_count
    feat = feat_flat.reshape(n, c_out, h, wd)          # NCHW, free reshape
    return feat, loss


# ---------------------------------------------------------------------------
# Pure-JAX reference (for correctness checks in __main__).
# ---------------------------------------------------------------------------
def _stem_reference(img_nchw, w, b):
    n, c_in, h, wd = img_nchw.shape
    x = img_nchw.reshape(n, c_in, h * wd)
    y = jnp.einsum("oc,ncs->nos", w, x) + b[None, :, :]
    y = jnp.maximum(y, 0.0)
    return y.reshape(n, w.shape[0], h, wd), jnp.mean(y)


# ---------------------------------------------------------------------------
# Minimal concrete BaseDetector reproducing the dispatch semantics.
# ---------------------------------------------------------------------------
class PallasBaseDetector:
    """Concrete stand-in for mmdet BaseDetector with a Pallas feature stem."""

    def __init__(self, in_channels=4, feat_channels=32, feat_dtype=jnp.float32):
        self.fp16_enabled = False
        self.feat_dtype = feat_dtype
        key = jax.random.PRNGKey(0)
        k_w, k_b = jax.random.split(key)
        # 1x1 conv stem parameters in PyTorch conv layout (C_out, C_in).
        self.w = (jax.random.normal(k_w, (feat_channels, in_channels),
                                    jnp.float32) * 0.1)
        self.b = (jax.random.normal(k_b, (feat_channels, 1), jnp.float32) * 0.01)

    # --- abstract hooks, made concrete -----------------------------------
    def extract_feat(self, img):
        return _stem_forward(img, self.w, self.b, feat_dtype=self.feat_dtype)

    def extract_feats(self, imgs):
        assert isinstance(imgs, list)
        return [self.extract_feat(img) for img in imgs]

    def forward_train(self, img, img_metas, **kwargs):
        _, loss = self.extract_feat(img)
        return {"loss_feat": loss}

    def simple_test(self, img, img_metas, **kwargs):
        feat, _ = self.extract_feat(img)
        return feat   # NCHW, matching the PyTorch layout

    def aug_test(self, imgs, img_metas, **kwargs):
        # TODO(synk): test-time augmentation fusion (multiscale/flip merge) has
        # no single-kernel equivalent; only simple_test is implemented.
        raise NotImplementedError

    # --- BaseDetector dispatch logic (verbatim semantics) -----------------
    def forward_test(self, imgs, img_metas, **kwargs):
        for var, name in [(imgs, "imgs"), (img_metas, "img_metas")]:
            if not isinstance(var, list):
                raise TypeError(f"{name} must be a list, but got {type(var)}")
        num_augs = len(imgs)
        if num_augs != len(img_metas):
            raise ValueError(
                f"num of augmentations ({len(imgs)}) != "
                f"num of image meta ({len(img_metas)})")
        samples_per_gpu = imgs[0].shape[0]
        assert samples_per_gpu == 1
        if num_augs == 1:
            if "proposals" in kwargs:
                kwargs["proposals"] = kwargs["proposals"][0]
            return self.simple_test(imgs[0], img_metas[0], **kwargs)
        else:
            assert "proposals" not in kwargs
            return self.aug_test(imgs, img_metas, **kwargs)

    def forward(self, img, img_metas, return_loss=True, **kwargs):
        if return_loss:
            return self.forward_train(img, img_metas, **kwargs)
        else:
            return self.forward_test(img, img_metas, **kwargs)


if __name__ == "__main__":
    key = jax.random.PRNGKey(0)
    k_img, k_img2 = jax.random.split(key)

    det = PallasBaseDetector(in_channels=4, feat_channels=32)

    # --- small-shape demo matching the module conventions (NCHW) ----------
    img = jax.random.normal(k_img, (2, 4, 16, 16), dtype=jnp.float32)
    img_metas = [
        {"img_shape": (16, 16, 4), "scale_factor": 1.0, "flip": False}
        for _ in range(2)
    ]

    # Training path: forward_train -> dict of losses.
    losses = det.forward(img, img_metas, return_loss=True)
    loss_val = jax.block_until_ready(losses["loss_feat"])

    # Test path: double-nested inputs, samples_per_gpu must be 1.
    test_img = [img[:1]]
    test_metas = [[img_metas[0]]]
    feat = det.forward(test_img, test_metas, return_loss=False)
    feat = jax.block_until_ready(feat)

    assert feat.shape == (1, 32, 16, 16)          # NCHW feature map
    assert bool(jnp.isfinite(loss_val))

    # Correctness vs. pure-JAX reference (small / single-step path).
    ref_feat, ref_loss = _stem_reference(img, det.w, det.b)
    my_feat, my_loss = det.extract_feat(img)
    assert jnp.allclose(my_feat, ref_feat, rtol=1e-2, atol=1e-2)
    assert jnp.allclose(my_loss, ref_loss, rtol=1e-2, atol=1e-2)

    # --- exercise the tiled production path (ragged tail + parallel batch) --
    # hw = 576, tile_s = 256 -> 3 spatial tiles, last one ragged (64 valid).
    img_t = jax.random.normal(k_img2, (2, 4, 24, 24), dtype=jnp.float32)
    feat_t, loss_t = _stem_forward(img_t, det.w, det.b,
                                   max_tile_s=256, small_limit_bytes=0)
    feat_t, loss_t = jax.block_until_ready((feat_t, loss_t))
    ref_feat_t, ref_loss_t = _stem_reference(img_t, det.w, det.b)
    assert feat_t.shape == (2, 32, 24, 24)
    assert jnp.allclose(feat_t, ref_feat_t, rtol=1e-2, atol=1e-2)
    assert jnp.allclose(loss_t, ref_loss_t, rtol=1e-2, atol=1e-2)

    print("KERNEL_OK")
</pallas_src>

<mosaic_0001>
module attributes {stable_mosaic.version = 11 : i64} {
  func.func @_stem_kernel_small(%arg0: i32, %arg1: memref<2x4x256xf32, #tpu.memory_space<vmem>>, %arg2: memref<32x4xf32, #tpu.memory_space<vmem>>, %arg3: memref<32x1xf32, #tpu.memory_space<vmem>>, %arg4: memref<2x32x256xf32, #tpu.memory_space<vmem>>, %arg5: memref<1x1xf32, #tpu.memory_space<vmem>>) attributes {dimension_semantics = [#tpu.dimension_semantics<arbitrary>], iteration_bounds = array<i64: 1>, scalar_prefetch = 0 : i64, scratch_operands = 0 : i64, tpu.core_type = #tpu.core_type<tc>, window_params = [{pipeline_mode = #tpu.pipeline_mode<synchronous>, transform_indices = @transform_0, window_bounds = array<i64: 2, 4, 256>}, {pipeline_mode = #tpu.pipeline_mode<synchronous>, transform_indices = @transform_1, window_bounds = array<i64: 32, 4>}, {pipeline_mode = #tpu.pipeline_mode<synchronous>, transform_indices = @transform_2, window_bounds = array<i64: 32, 1>}, {pipeline_mode = #tpu.pipeline_mode<synchronous>, transform_indices = @transform_3, window_bounds = array<i64: 2, 32, 256>}, {pipeline_mode = #tpu.pipeline_mode<synchronous>, transform_indices = @transform_4, window_bounds = array<i64: 1, 1>}]} {
    %cst = arith.constant 0.000000e+00 : f32
    %0 = vector.broadcast %cst : f32 to vector<1x1xf32>
    %c0 = arith.constant 0 : index
    %c0_0 = arith.constant 0 : index
    %1 = vector.load %arg2[%c0, %c0_0] : memref<32x4xf32, #tpu.memory_space<vmem>>, vector<32x4xf32>
    %c0_1 = arith.constant 0 : index
    %c0_2 = arith.constant 0 : index
    %c0_3 = arith.constant 0 : index
    %2 = vector.load %arg1[%c0_1, %c0_2, %c0_3] : memref<2x4x256xf32, #tpu.memory_space<vmem>>, vector<1x4x256xf32>
    %3 = vector.shape_cast %2 : vector<1x4x256xf32> to vector<4x256xf32>
    %cst_4 = arith.constant dense<0.000000e+00> : vector<32x256xf32>
    %4 = tpu.matmul %1, %3, %cst_4 {dimension_numbers = #tpu.dot_dimension_numbers<[1], [0], [0], [1], [0, 0, 1, 1], [], []>} : vector<32x4xf32>, vector<4x256xf32>, vector<32x256xf32> -> vector<32x256xf32>
    %c0_5 = arith.constant 0 : index
    %c0_6 = arith.constant 0 : index
    %5 = vector.load %arg3[%c0_5, %c0_6] : memref<32x1xf32, #tpu.memory_space<vmem>>, vector<32x1xf32>
    %6 = vector.broadcast %5 : vector<32x1xf32> to vector<32x256xf32>
    %7 = arith.addf %4, %6 : vector<32x256xf32>
    %cst_7 = arith.constant 0.000000e+00 : f32
    %8 = vector.broadcast %cst_7 : f32 to vector<32x256xf32>
    %9 = arith.maximumf %7, %8 : vector<32x256xf32>
    %c0_8 = arith.constant 0 : index
    %c0_9 = arith.constant 0 : index
    %c0_10 = arith.constant 0 : index
    %10 = vector.load %arg4[%c0_8, %c0_9, %c0_10] : memref<2x32x256xf32, #tpu.memory_space<vmem>>, vector<1x32x256xf32>
    %11 = vector.shape_cast %10 : vector<1x32x256xf32> to vector<32x256xf32>
    %12 = vector.shape_cast %9 : vector<32x256xf32> to vector<1x32x256xf32>
    tpu.vector_store %arg4[%c0_8, %c0_9, %c0_10], %12 {strides = array<i32>} : memref<2x32x256xf32, #tpu.memory_space<vmem>>, vector<1x32x256xf32>,
    %cst_11 = arith.constant dense<0.000000e+00> : vector<32xf32>
    %13 = vector.multi_reduction <add>, %9, %cst_11 [1] : vector<32x256xf32> to vector<32xf32>
    %14 = vector.shape_cast %13 : vector<32xf32> to vector<32x1xf32>
    %cst_12 = arith.constant dense<0.000000e+00> : vector<1xf32>
    %15 = vector.multi_reduction <add>, %14, %cst_12 [0] : vector<32x1xf32> to vector<1xf32>
    %16 = vector.shape_cast %15 : vector<1xf32> to vector<1x1xf32>
    %17 = arith.addf %0, %16 : vector<1x1xf32>
    %c0_13 = arith.constant 0 : index
    %c0_14 = arith.constant 0 : index
    %18 = vector.load %arg2[%c0_13, %c0_14] : memref<32x4xf32, #tpu.memory_space<vmem>>, vector<32x4xf32>
    %c1 = arith.constant 1 : index
    %c0_15 = arith.constant 0 : index
    %c0_16 = arith.constant 0 : index
    %19 = vector.load %arg1[%c1, %c0_15, %c0_16] : memref<2x4x256xf32, #tpu.memory_space<vmem>>, vector<1x4x256xf32>
    %20 = vector.shape_cast %19 : vector<1x4x256xf32> to vector<4x256xf32>
    %cst_17 = arith.constant dense<0.000000e+00> : vector<32x256xf32>
    %21 = tpu.matmul %18, %20, %cst_17 {dimension_numbers = #tpu.dot_dimension_numbers<[1], [0], [0], [1], [0, 0, 1, 1], [], []>} : vector<32x4xf32>, vector<4x256xf32>, vector<32x256xf32> -> vector<32x256xf32>
    %c0_18 = arith.constant 0 : index
    %c0_19 = arith.constant 0 : index
    %22 = vector.load %arg3[%c0_18, %c0_19] : memref<32x1xf32, #tpu.memory_space<vmem>>, vector<32x1xf32>
    %23 = vector.broadcast %22 : vector<32x1xf32> to vector<32x256xf32>
    %24 = arith.addf %21, %23 : vector<32x256xf32>
    %cst_20 = arith.constant 0.000000e+00 : f32
    %25 = vector.broadcast %cst_20 : f32 to vector<32x256xf32>
    %26 = arith.maximumf %24, %25 : vector<32x256xf32>
    %c1_21 = arith.constant 1 : index
    %c0_22 = arith.constant 0 : index
    %c0_23 = arith.constant 0 : index
    %27 = vector.load %arg4[%c1_21, %c0_22, %c0_23] : memref<2x32x256xf32, #tpu.memory_space<vmem>>, vector<1x32x256xf32>
    %28 = vector.shape_cast %27 : vector<1x32x256xf32> to vector<32x256xf32>
    %29 = vector.shape_cast %26 : vector<32x256xf32> to vector<1x32x256xf32>
    tpu.vector_store %arg4[%c1_21, %c0_22, %c0_23], %29 {strides = array<i32>} : memref<2x32x256xf32, #tpu.memory_space<vmem>>, vector<1x32x256xf32>,
    %cst_24 = arith.constant dense<0.000000e+00> : vector<32xf32>
    %30 = vector.multi_reduction <add>, %26, %cst_24 [1] : vector<32x256xf32> to vector<32xf32>
    %31 = vector.shape_cast %30 : vector<32xf32> to vector<32x1xf32>
    %cst_25 = arith.constant dense<0.000000e+00> : vector<1xf32>
    %32 = vector.multi_reduction <add>, %31, %cst_25 [0] : vector<32x1xf32> to vector<1xf32>
    %33 = vector.shape_cast %32 : vector<1xf32> to vector<1x1xf32>
    %34 = arith.addf %17, %33 : vector<1x1xf32>
    %c0_26 = arith.constant 0 : index
    %c0_27 = arith.constant 0 : index
    %35 = vector.load %arg5[%c0_26, %c0_27] : memref<1x1xf32, #tpu.memory_space<vmem>>, vector<1x1xf32>
    tpu.vector_store %arg5[%c0_26, %c0_27], %34 {strides = array<i32>} : memref<1x1xf32, #tpu.memory_space<vmem>>, vector<1x1xf32>,
    return
  }
  func.func @transform_0(%arg0: i32) -> (i32, i32, i32) {
    %c0_i32 = arith.constant 0 : i32
    %c0_i32_0 = arith.constant 0 : i32
    %c0_i32_1 = arith.constant 0 : i32
    %c0_i32_2 = arith.constant 0 : i32
    return %c0_i32, %c0_i32_0, %c0_i32_1 : i32, i32, i32
  }
  func.func @transform_1(%arg0: i32) -> (i32, i32) {
    %c0_i32 = arith.constant 0 : i32
    %c0_i32_0 = arith.constant 0 : i32
    %c0_i32_1 = arith.constant 0 : i32
    return %c0_i32, %c0_i32_0 : i32, i32
  }
  func.func @transform_2(%arg0: i32) -> (i32, i32) {
    %c0_i32 = arith.constant 0 : i32
    %c0_i32_0 = arith.constant 0 : i32
    %c0_i32_1 = arith.constant 0 : i32
    return %c0_i32, %c0_i32_0 : i32, i32
  }
  func.func @transform_3(%arg0: i32) -> (i32, i32, i32) {
    %c0_i32 = arith.constant 0 : i32
    %c0_i32_0 = arith.constant 0 : i32
    %c0_i32_1 = arith.constant 0 : i32
    %c0_i32_2 = arith.constant 0 : i32
    return %c0_i32, %c0_i32_0, %c0_i32_1 : i32, i32, i32
  }
  func.func @transform_4(%arg0: i32) -> (i32, i32) {
    %c0_i32 = arith.constant 0 : i32
    %c0_i32_0 = arith.constant 0 : i32
    %c0_i32_1 = arith.constant 0 : i32
    return %c0_i32, %c0_i32_0 : i32, i32
  }
}

</mosaic_0001>

<llo_original>
// kernel: tpu_custom_call.1
$region0: #{tpu_custom_call.1}
  #allocation0 [shape = 'u32[]', space=smem, size = 0x4, offset = 0x4, fixed_abs, tag = 'smem constant byte address 0x4 - core index']
  #allocation1 [shape = 'u32[144,128]{1,0:T(1,128)}', space=vmem, size = 0x12000, scoped, tag = 'internal scratch']
  %s0 = inlined_call_operand.vmem [shape: f32[2,4,256], index: 0, kind: input, shape index: {}]
  %s1 = inlined_call_operand.vmem [shape: f32[32,4], index: 1, kind: input, shape index: {}]
  %s2 = inlined_call_operand.vmem [shape: f32[32,1], index: 2, kind: input, shape index: {}]
  %s3 = inlined_call_operand.hbm [shape: f32[2,32,256], index: 3, kind: output, shape index: {0}]
  %s4 = inlined_call_operand.hbm [shape: f32[1,1], index: 4, kind: output, shape index: {1}]
  %5 = xla_tuple %s3, %s4
  %s6 = sld [smem:[#allocation0]]
  $region30: #{tpu_custom_call.1} parent=0
    _
  %s8 = ssub.s32 1, %s6
  %s9 = scalar_select 0, %s8, %s6
  $region1: #{tpu_custom_call.1} parent=0
    #allocation2 [shape = 'u8[65536]{0}', space=vmem, size = 0x10000, scoped, tag = 'output window, operand 0, single buffered']
    #allocation3 [shape = 's32[1]{0}', space=sflag, size = 0x4, scoped, tag = 'scoped memory for tpu_custom_call.1']
    #allocation4 [shape = 'u8[512]{0}', space=vmem, size = 0x400, scoped, tag = 'output window, operand 1, single buffered']
    #allocation5 [shape = 's32[1]{0}', space=sflag, size = 0x4, scoped, tag = 'scoped memory for tpu_custom_call.1']
    %10 = vsyncpa [#allocation3], 0
    %11 = vsyncpa [#allocation5], 0
    // Predicated region
    $region2: #{tpu_custom_call.1} parent=1 // pred_check
      _
    $region3: #{tpu_custom_call.1} parent=1 // pred_check_branch
      %13 = sbr.rel (0) target = $region5
    $region4: #{tpu_custom_call.1} parent=1 // pred_region
      _
    $region5: #{tpu_custom_call.1} parent=1 // pred_fallthru
      _
    // Predicated region
    $region6: #{tpu_custom_call.1} parent=1 // pred_check
      _
    $region7: #{tpu_custom_call.1} parent=1 // pred_check_branch
      %15 = sbr.rel (0) target = $region9
    $region8: #{tpu_custom_call.1} parent=1 // pred_region
      _
    $region9: #{tpu_custom_call.1} parent=1 // pred_fallthru
      _
    // Predicated region
    $region10: #{tpu_custom_call.1} parent=1 // pred_check
      _
    $region11: #{tpu_custom_call.1} parent=1 // pred_check_branch
      %17 = sbr.rel (0) target = $region13
    $region12: #{tpu_custom_call.1} parent=1 // pred_region
      _
    $region13: #{tpu_custom_call.1} parent=1 // pred_fallthru
      _
    %v18 = vld [vmem:[%s1] sm:$0xff]
    %v19 = vld [vmem:[%s1 + $0x8] sm:$0xff]
    %v20 = vld [vmem:[%s1 + $0x10] sm:$0xff]
    %v21 = vld [vmem:[%s1 + $0x18] sm:$0xff]
    %v22 = vld [vmem:[%s0] sm:$0xff]
    %v23 = vld [vmem:[%s2] sm:$0xff]
    %v24 = vld [vmem:[%s2 + $0x8] sm:$0xff]
    %v25 = vld [vmem:[%s2 + $0x10] sm:$0xff]
    %v26 = vld [vmem:[%s2 + $0x18] sm:$0xff]
    %28 = vset.pattern.permute.xlu0 0
    %29 = vperm.xlu0 %28, %v23
    %v30 = vpop.permute.xlu0 %29
    %33 = vset.pattern.permute.xlu0 0
    %34 = vperm.xlu0 %33, %v24
    %v35 = vpop.permute.xlu0 %34
    %38 = vset.pattern.permute.xlu0 0
    %39 = vperm.xlu0 %38, %v25
    %v40 = vpop.permute.xlu0 %39
    %43 = vset.pattern.permute.xlu0 0
    %44 = vperm.xlu0 %43, %v26
    %v45 = vpop.permute.xlu0 %44
    %v48 = vcombine.high %v22, %v22
    %vm49 = vcmask 31744
    %v51 = vsel %vm49, %v18, 0
    %v54 = vsel %vm49, %v19, 0
    %v57 = vsel %vm49, %v20, 0
    %v60 = vsel %vm49, %v21, 0
    %vm62 = vcmask 1043456
    %v63 = vsel %vm62, %v22, 0
    %v65 = vsel %vm62, %v48, 0
    %67 = vmatprep.subr.mxu0 0.0
    %68 = vmatpush1.msra.mxu0 0.0
    %69 = vmatprep.subr.mxu0 0.0
    %70 = vmatpush1.msra.mxu0 0.0
    %71 = vmatprep.subr.mxu0 0.0
    %72 = vmatpush1.msra.mxu0 0.0
    %73 = vmatprep.subr.mxu0 0.0
    %74 = vmatpush1.msra.mxu0 0.0
    %75 = vmatprep.subr.mxu0 0.0
    %76 = vmatpush1.msra.mxu0 0.0
    %77 = vmatprep.subr.mxu0 0.0
    %78 = vmatpush1.msra.mxu0 0.0
    %79 = vmatprep.subr.mxu0 0.0
    %80 = vmatpush1.msra.mxu0 0.0
    %81 = vmatprep.subr.mxu0 0.0
    %82 = vmatpush1.msra.mxu0 0.0
    %83 = vmatprep.subr.mxu0 0.0
    %84 = vmatpush1.msra.mxu0 0.0
    %85 = vmatprep.subr.mxu0 0.0
    %86 = vmatpush1.msra.mxu0 0.0
    %87 = vmatprep.subr.mxu0 0.0
    %88 = vmatpush1.msra.mxu0 0.0
    %89 = vmatprep.subr.mxu0 0.0
    %90 = vmatpush1.msra.mxu0 0.0
    %91 = vmatprep.subr.mxu0 0.0
    %92 = vmatpush1.msra.mxu0 0.0
    %93 = vmatprep.subr.mxu0 0.0
    %94 = vmatpush1.msra.mxu0 0.0
    %95 = vmatprep.subr.mxu0 0.0
    %96 = vmatpush1.msra.mxu0 0.0
    %97 = vmatprep.subr.mxu0 %v65
    %98 = vmatpush1.msra.mxu0 %v63
    %99 = vmatprep.subr.mxu0 0.0
    %100 = vmatpush2.msra.mxu0 0.0
    %101 = vmatprep.subr.mxu0 0.0
    %102 = vmatpush2.msra.mxu0 0.0
    %103 = vmatprep.subr.mxu0 0.0
    %104 = vmatpush2.msra.mxu0 0.0
    %105 = vmatprep.subr.mxu0 0.0
    %106 = vmatpush2.msra.mxu0 0.0
    %107 = vmatprep.subr.mxu0 0.0
    %108 = vmatpush2.msra.mxu0 0.0
    %109 = vmatprep.subr.mxu0 0.0
    %110 = vmatpush2.msra.mxu0 0.0
    %111 = vmatprep.subr.mxu0 0.0
    %112 = vmatpush2.msra.mxu0 0.0
    %113 = vmatprep.subr.mxu0 0.0
    %114 = vmatpush2.msra.mxu0 0.0
    %115 = vmatprep.subr.mxu0 0.0
    %116 = vmatpush2.msra.mxu0 0.0
    %117 = vmatprep.subr.mxu0 0.0
    %118 = vmatpush2.msra.mxu0 0.0
    %119 = vmatprep.subr.mxu0 0.0
    %120 = vmatpush2.msra.mxu0 0.0
    %121 = vmatprep.subr.mxu0 0.0
    %122 = vmatpush2.msra.mxu0 0.0
    %123 = vmatprep.subr.mxu0 0.0
    %124 = vmatpush2.msra.mxu0 0.0
    %125 = vmatprep.subr.mxu0 0.0
    %126 = vmatpush2.msra.mxu0 0.0
    %127 = vmatprep.subr.mxu0 0.0
    %128 = vmatpush2.msra.mxu0 0.0
    %129 = vmatprep.subr.mxu0 0.0
    %130 = vmatpush2.msra.mxu0 0.0
    %131 = vmatprep.mubr.f32.mxu0 0.0
    %132 = vmatmul.mubr.f32.gmra.mxu0 %v51
    %v133 = vpop.f32.mrf.mxu0
    %v134 = vadd.f32 %v30, %v133
    %v135 = vpop.f32.mrf.mxu0
    %v136 = vadd.f32 %v30, %v135
    %137 = vmatprep.mubr.f32.mxu0 0.0
    %138 = vmatmul.mubr.f32.gmra.mxu0 %v54
    %v139 = vpop.f32.mrf.mxu0
    %v140 = vadd.f32 %v35, %v139
    %v141 = vpop.f32.mrf.mxu0
    %v142 = vadd.f32 %v35, %v141
    %143 = vmatprep.mubr.f32.mxu0 0.0
    %144 = vmatmul.mubr.f32.gmra.mxu0 %v57
    %v145 = vpop.f32.mrf.mxu0
    %v146 = vadd.f32 %v40, %v145
    %v147 = vpop.f32.mrf.mxu0
    %v148 = vadd.f32 %v40, %v147
    %149 = vmatprep.mubr.f32.mxu0 0.0
    %150 = vmatmul.mubr.f32.gmra.mxu0 %v60
    %v151 = vpop.f32.mrf.mxu0
    %v152 = vadd.f32 %v45, %v151
    %v153 = vpop.f32.mrf.mxu0
    %v154 = vadd.f32 %v45, %v153
    %155 = vdwg.mxu0
    %v156 = vmax.f32 %v134, 0.0
    %v157 = vmax.f32 %v136, 0.0
    %v158 = vmax.f32 %v140, 0.0
    %v159 = vmax.f32 %v142, 0.0
    %v160 = vmax.f32 %v146, 0.0
    %v161 = vmax.f32 %v148, 0.0
    %v162 = vmax.f32 %v152, 0.0
    %v163 = vmax.f32 %v154, 0.0
    %164 = vst [vmem:[#allocation2] sm:$0xff] %v156
    %165 = vst [vmem:[#allocation2 + $0x8] sm:$0xff] %v157
    %166 = vst [vmem:[#allocation2 + $0x10] sm:$0xff] %v158
    %167 = vst [vmem:[#allocation2 + $0x18] sm:$0xff] %v159
    %168 = vst [vmem:[#allocation2 + $0x20] sm:$0xff] %v160
    %169 = vst [vmem:[#allocation2 + $0x28] sm:$0xff] %v161
    %170 = vst [vmem:[#allocation2 + $0x30] sm:$0xff] %v162
    %171 = vst [vmem:[#allocation2 + $0x38] sm:$0xff] %v163
    %v172 = vadd.f32 %v156, %v157
    %173 = vadd.xlane.f32.xlu0 %v172
    %v174 = vpop.xlane.xlu0 %173
    %v175 = vadd.f32 %v158, %v159
    %176 = vadd.xlane.f32.xlu0 %v175
    %v177 = vpop.xlane.xlu0 %176
    %v178 = vadd.f32 %v160, %v161
    %179 = vadd.xlane.f32.xlu0 %v178
    %v180 = vpop.xlane.xlu0 %179
    %v181 = vadd.f32 %v162, %v163
    %182 = vadd.xlane.f32.xlu0 %v181
    %v183 = vpop.xlane.xlu0 %182
    %v184 = vadd.f32 %v174, %v177
    %v185 = vadd.f32 %v184, %v180
    %v186 = vadd.f32 %v185, %v183
    %v187 = vrot.slane %v186, 4
    %v188 = vadd.f32 %v186, %v187
    %v189 = vrot.slane %v188, 2
    %v190 = vadd.f32 %v188, %v189
    %v191 = vrot.slane %v190, 1
    %v192 = vadd.f32 %v190, %v191
    %v193 = vadd.f32 %v192, 0.0
    %v194 = vld [vmem:[%s1] sm:$0xff]
    %v195 = vld [vmem:[%s1 + $0x8] sm:$0xff]
    %v196 = vld [vmem:[%s1 + $0x10] sm:$0xff]
    %v197 = vld [vmem:[%s1 + $0x18] sm:$0xff]
    %s198 = scalar_lea.vmem %s0, 8
    %v199 = vld [vmem:[%s198] sm:$0xff]
    %v200 = vld [vmem:[%s2] sm:$0xff]
    %v201 = vld [vmem:[%s2 + $0x8] sm:$0xff]
    %v202 = vld [vmem:[%s2 + $0x10] sm:$0xff]
    %v203 = vld [vmem:[%s2 + $0x18] sm:$0xff]
    %205 = vset.pattern.permute.xlu0 0
    %206 = vperm.xlu0 %205, %v200
    %v207 = vpop.permute.xlu0 %206
    %210 = vset.pattern.permute.xlu0 0
    %211 = vperm.xlu0 %210, %v201
    %v212 = vpop.permute.xlu0 %211
    %215 = vset.pattern.permute.xlu0 0
    %216 = vperm.xlu0 %215, %v202
    %v217 = vpop.permute.xlu0 %216
    %220 = vset.pattern.permute.xlu0 0
    %221 = vperm.xlu0 %220, %v203
    %v222 = vpop.permute.xlu0 %221
    %v225 = vcombine.high %v199, %v199
    %v227 = vsel %vm49, %v194, 0
    %v230 = vsel %vm49, %v195, 0
    %v233 = vsel %vm49, %v196, 0
    %v236 = vsel %vm49, %v197, 0
    %v238 = vsel %vm62, %v199, 0
    %v240 = vsel %vm62, %v225, 0
    %242 = vmatprep.subr.mxu0 0.0
    %243 = vmatpush1.msra.mxu0 0.0
    %244 = vmatprep.subr.mxu0 0.0
    %245 = vmatpush1.msra.mxu0 0.0
    %246 = vmatprep.subr.mxu0 0.0
    %247 = vmatpush1.msra.mxu0 0.0
    %248 = vmatprep.subr.mxu0 0.0
    %249 = vmatpush1.msra.mxu0 0.0
    %250 = vmatprep.subr.mxu0 0.0
    %251 = vmatpush1.msra.mxu0 0.0
    %252 = vmatprep.subr.mxu0 0.0
    %253 = vmatpush1.msra.mxu0 0.0
    %254 = vmatprep.subr.mxu0 0.0
    %255 = vmatpush1.msra.mxu0 0.0
    %256 = vmatprep.subr.mxu0 0.0
    %257 = vmatpush1.msra.mxu0 0.0
    %258 = vmatprep.subr.mxu0 0.0
    %259 = vmatpush1.msra.mxu0 0.0
    %260 = vmatprep.subr.mxu0 0.0
    %261 = vmatpush1.msra.mxu0 0.0
    %262 = vmatprep.subr.mxu0 0.0
    %263 = vmatpush1.msra.mxu0 0.0
    %264 = vmatprep.subr.mxu0 0.0
    %265 = vmatpush1.msra.mxu0 0.0
    %266 = vmatprep.subr.mxu0 0.0
    %267 = vmatpush1.msra.mxu0 0.0
    %268 = vmatprep.subr.mxu0 0.0
    %269 = vmatpush1.msra.mxu0 0.0
    %270 = vmatprep.subr.mxu0 0.0
    %271 = vmatpush1.msra.mxu0 0.0
    %272 = vmatprep.subr.mxu0 %v240
    %273 = vmatpush1.msra.mxu0 %v238
    %274 = vmatprep.subr.mxu0 0.0
    %275 = vmatpush2.msra.mxu0 0.0
    %276 = vmatprep.subr.mxu0 0.0
    %277 = vmatpush2.msra.mxu0 0.0
    %278 = vmatprep.subr.mxu0 0.0
    %279 = vmatpush2.msra.mxu0 0.0
    %280 = vmatprep.subr.mxu0 0.0
    %281 = vmatpush2.msra.mxu0 0.0
    %282 = vmatprep.subr.mxu0 0.0
    %283 = vmatpush2.msra.mxu0 0.0
    %284 = vmatprep.subr.mxu0 0.0
    %285 = vmatpush2.msra.mxu0 0.0
    %286 = vmatprep.subr.mxu0 0.0
    %287 = vmatpush2.msra.mxu0 0.0
    %288 = vmatprep.subr.mxu0 0.0
    %289 = vmatpush2.msra.mxu0 0.0
    %290 = vmatprep.subr.mxu0 0.0
    %291 = vmatpush2.msra.mxu0 0.0
    %292 = vmatprep.subr.mxu0 0.0
    %293 = vmatpush2.msra.mxu0 0.0
    %294 = vmatprep.subr.mxu0 0.0
    %295 = vmatpush2.msra.mxu0 0.0
    %296 = vmatprep.subr.mxu0 0.0
    %297 = vmatpush2.msra.mxu0 0.0
    %298 = vmatprep.subr.mxu0 0.0
    %299 = vmatpush2.msra.mxu0 0.0
    %300 = vmatprep.subr.mxu0 0.0
    %301 = vmatpush2.msra.mxu0 0.0
    %302 = vmatprep.subr.mxu0 0.0
    %303 = vmatpush2.msra.mxu0 0.0
    %304 = vmatprep.subr.mxu0 0.0
    %305 = vmatpush2.msra.mxu0 0.0
    %306 = vmatprep.mubr.f32.mxu0 0.0
    %307 = vmatmul.mubr.f32.gmra.mxu0 %v227
    %v308 = vpop.f32.mrf.mxu0
    %v309 = vadd.f32 %v207, %v308
    %v310 = vpop.f32.mrf.mxu0
    %v311 = vadd.f32 %v207, %v310
    %312 = vmatprep.mubr.f32.mxu0 0.0
    %313 = vmatmul.mubr.f32.gmra.mxu0 %v230
    %v314 = vpop.f32.mrf.mxu0
    %v315 = vadd.f32 %v212, %v314
    %v316 = vpop.f32.mrf.mxu0
    %v317 = vadd.f32 %v212, %v316
    %318 = vmatprep.mubr.f32.mxu0 0.0
    %319 = vmatmul.mubr.f32.gmra.mxu0 %v233
    %v320 = vpop.f32.mrf.mxu0
    %v321 = vadd.f32 %v217, %v320
    %v322 = vpop.f32.mrf.mxu0
    %v323 = vadd.f32 %v217, %v322
    %324 = vmatprep.mubr.f32.mxu0 0.0
    %325 = vmatmul.mubr.f32.gmra.mxu0 %v236
    %v326 = vpop.f32.mrf.mxu0
    %v327 = vadd.f32 %v222, %v326
    %v328 = vpop.f32.mrf.mxu0
    %v329 = vadd.f32 %v222, %v328
    %330 = vdwg.mxu0
    %v331 = vmax.f32 %v309, 0.0
    %v332 = vmax.f32 %v311, 0.0
    %v333 = vmax.f32 %v315, 0.0
    %v334 = vmax.f32 %v317, 0.0
    %v335 = vmax.f32 %v321, 0.0
    %v336 = vmax.f32 %v323, 0.0
    %v337 = vmax.f32 %v327, 0.0
    %v338 = vmax.f32 %v329, 0.0
    %s339 = scalar_lea.vmem [#allocation2], 64
    %340 = vst [vmem:[%s339] sm:$0xff] %v331
    %341 = vst [vmem:[%s339 + $0x8] sm:$0xff] %v332
    %342 = vst [vmem:[%s339 + $0x10] sm:$0xff] %v333
    %343 = vst [vmem:[%s339 + $0x18] sm:$0xff] %v334
    %344 = vst [vmem:[%s339 + $0x20] sm:$0xff] %v335
    %345 = vst [vmem:[%s339 + $0x28] sm:$0xff] %v336
    %346 = vst [vmem:[%s339 + $0x30] sm:$0xff] %v337
    %347 = vst [vmem:[%s339 + $0x38] sm:$0xff] %v338
    %v348 = vadd.f32 %v331, %v332
    %349 = vadd.xlane.f32.xlu0 %v348
    %v350 = vpop.xlane.xlu0 %349
    %v351 = vadd.f32 %v333, %v334
    %352 = vadd.xlane.f32.xlu0 %v351
    %v353 = vpop.xlane.xlu0 %352
    %v354 = vadd.f32 %v335, %v336
    %355 = vadd.xlane.f32.xlu0 %v354
    %v356 = vpop.xlane.xlu0 %355
    %v357 = vadd.f32 %v337, %v338
    %358 = vadd.xlane.f32.xlu0 %v357
    %v359 = vpop.xlane.xlu0 %358
    %v360 = vadd.f32 %v350, %v353
    %v361 = vadd.f32 %v360, %v356
    %v362 = vadd.f32 %v361, %v359
    %v363 = vrot.slane %v362, 4
    %v364 = vadd.f32 %v362, %v363
    %v365 = vrot.slane %v364, 2
    %v366 = vadd.f32 %v364, %v365
    %v367 = vrot.slane %v366, 1
    %v368 = vadd.f32 %v366, %v367
    %v369 = vadd.f32 %v193, %v368
    %vm370 = vcmask 0
    %371 = vst.msk [vmem:[#allocation4] sm:$0x1] %vm370, %v369
    // Predicated region
    $region14: #{tpu_custom_call.1} parent=1 // pred_check
      _
    $region15: #{tpu_custom_call.1} parent=1 // pred_check_branch
      %373 = sbr.rel (0) target = $region17
    $region16: #{tpu_custom_call.1} parent=1 // pred_region
      %s375 = ssub.s32 2048, 2048
      %376 = vsyncadd [#allocation3], %s375
      %s377 = sshll.u32 [#allocation2], 4
      %s378 = int_to_ptr.vmem [resolvable:$true] %s377
      %383 = dma.vmem_to_hbm [thread:$0]  %s378, 2048, %s3, [#allocation3], 256, 256, 16
    $region17: #{tpu_custom_call.1} parent=1 // pred_fallthru
      _
    // Predicated region
    $region18: #{tpu_custom_call.1} parent=1 // pred_check
      _
    $region19: #{tpu_custom_call.1} parent=1 // pred_check_branch
      %385 = sbr.rel (0) target = $region21
    $region20: #{tpu_custom_call.1} parent=1 // pred_region
      %s387 = ssub.s32 16, 16
      %388 = vsyncadd [#allocation5], %s387
      %s390 = sshll.u32 [#allocation4], 4
      %s391 = int_to_ptr.vmem [resolvable:$true] %s390
      %393 = dma.vmem_to_hbm [thread:$0]  %s391, 16, %s4, [#allocation5]
    $region21: #{tpu_custom_call.1} parent=1 // pred_fallthru
      _
    // Predicated region
    $region22: #{tpu_custom_call.1} parent=1 // pred_check
      _
    $region23: #{tpu_custom_call.1} parent=1 // pred_check_branch
      %395 = sbr.rel (0) target = $region25
    $region24: #{tpu_custom_call.1} parent=1 // pred_region
      %396 = dma.done [#allocation3], 2048
    $region25: #{tpu_custom_call.1} parent=1 // pred_fallthru
      _
    // Predicated region
    $region26: #{tpu_custom_call.1} parent=1 // pred_check
      _
    $region27: #{tpu_custom_call.1} parent=1 // pred_check_branch
      %398 = sbr.rel (0) target = $region29
    $region28: #{tpu_custom_call.1} parent=1 // pred_region
      %399 = dma.done [#allocation5], 16
    $region29: #{tpu_custom_call.1} parent=1 // pred_fallthru
      _
    %400 = vsyncpa [#allocation3], 1
    %401 = vsyncpa [#allocation5], 1

</llo_original>
